<compile_context>
chip_gen: v5e
topology: v5e:2x2
jax: 0.10.0
libtpu: 0.0.40
codegen_flags: <defaults>
</compile_context>

<pallas_src>
import jax
import jax.numpy as jnp
import numpy as np
from jax.experimental import pallas as pl
from jax.experimental.pallas import tpu as pltpu


# ---------------------------------------------------------------------------
# Pallas kernel: fused forward over TN tokens per grid step
#   conv (im2col GEMM, bf16 -> f32 acc) -> ReLU -> spatial mean pool
#   -> folded video/audio linear -> folded bias
# ---------------------------------------------------------------------------
def sbe_kernel(patches_ref, audio_ref,
               wc_ref, bc_ref,          # conv weights  (K,F) bf16, (1,F) f32
               w1_ref, w2_ref, b_ref,   # folded fc chain (F,F) bf16, (A,F) bf16, (1,F) f32
               out_ref):                # (TN, F) f32
    rows, _ = patches_ref.shape         # rows = TN * P
    tn, _ = audio_ref.shape
    p = rows // tn
    f = out_ref.shape[-1]

    # conv-as-GEMM over all TN*P patch rows of this step (bf16 MXU, f32 acc)
    conv = jnp.dot(patches_ref[...], wc_ref[...],
                   preferred_element_type=jnp.float32) + bc_ref[...]
    conv = jnp.maximum(conv, 0.0)                               # ReLU (f32, VPU)

    # spatial mean pool: layout-free split of the sublane dim (P multiple of 8)
    pooled = jnp.mean(conv.reshape(tn, p, f), axis=1)           # (TN, F) f32, XLU

    # folded linear chain: pooled@W1 + audio@W2 + b  (bf16 MXU, f32 acc/bias)
    fused = (jnp.dot(pooled.astype(jnp.bfloat16), w1_ref[...],
                     preferred_element_type=jnp.float32)
             + jnp.dot(audio_ref[...], w2_ref[...],
                       preferred_element_type=jnp.float32)
             + b_ref[...])
    out_ref[...] = fused.astype(out_ref.dtype)                  # lane-dense (TN, 128)


# ---------------------------------------------------------------------------
# Glue: im2col for Conv3d(k=(3,3,3), stride=(1,2,2), pad=(1,1,1))
# ---------------------------------------------------------------------------
def im2col_3d(x):
    # x: (B, T, H, W, C) channels-last
    B, T, H, W, C = x.shape
    kt, kh, kw = 3, 3, 3
    st, sh, sw = 1, 2, 2
    pt, ph, pw = 1, 1, 1
    To = (T + 2 * pt - kt) // st + 1
    Ho = (H + 2 * ph - kh) // sh + 1
    Wo = (W + 2 * pw - kw) // sw + 1
    xp = jnp.pad(x, ((0, 0), (pt, pt), (ph, ph), (pw, pw), (0, 0)))
    cols = []
    for dt in range(kt):
        for dh in range(kh):
            for dw in range(kw):
                sl = xp[:, dt:dt + To * st:st,
                           dh:dh + Ho * sh:sh,
                           dw:dw + Wo * sw:sw, :]
                cols.append(sl)                       # (B, To, Ho, Wo, C)
    patches = jnp.stack(cols, axis=-2)                # (B, To, Ho, Wo, 27, C)
    patches = patches.reshape(B, To, Ho * Wo, kt * kh * kw * C)
    return patches, (To, Ho, Wo)


# ---------------------------------------------------------------------------
# Tile-size heuristic: biggest token batch whose VMEM working set fits a
# conservative budget (double-buffered bf16 patch slab + f32 conv scratch),
# while keeping >= 2 grid steps for v7x megacore when possible.
# ---------------------------------------------------------------------------
def _choose_tokens_per_step(N, P, K, F, budget_bytes=8 << 20):
    per_token = 2 * P * K * 2 + P * F * 4        # 2x-buffered patches + conv f32
    cap = max(8, budget_bytes // max(per_token, 1))
    if N // 2 >= 8:
        cap = min(cap, N // 2)                    # keep grid >= 2 parallel steps
    tn, d = 8, 8
    while d <= min(N, cap):
        if N % d == 0:
            tn = d
        d += 8
    return tn


# ---------------------------------------------------------------------------
# Wrapper
# ---------------------------------------------------------------------------
def speaker_behaviour_encoder(video, audio, kparams, *, tokens_per_step=None):
    """video: (B, T, 3, H, W)  audio: (B, T, A)  ->  (B, T, F)"""
    B, T, C, H, W = video.shape
    A = audio.shape[-1]
    F = kparams["bc"].shape[-1]

    # channels-last, cast to bf16 *before* im2col so the 27x-expanded patch
    # slab written to HBM is half the bytes, then im2col (glue).
    video_cl = jnp.transpose(video, (0, 1, 3, 4, 2)).astype(jnp.bfloat16)
    patches, (To, Ho, Wo) = im2col_3d(video_cl)               # (B,T,P,K) bf16
    assert To == T
    P = Ho * Wo
    K = patches.shape[-1]
    N = B * T

    if tokens_per_step is None:
        tokens_per_step = _choose_tokens_per_step(N, P, K, F)
    TN = tokens_per_step
    assert N % TN == 0 and TN % 8 == 0 and P % 8 == 0

    patches_f = patches.reshape(N * P, K)                     # bf16
    audio_f = audio.reshape(N, A).astype(jnp.bfloat16)

    grid = (N // TN,)

    out = pl.pallas_call(
        sbe_kernel,
        out_shape=jax.ShapeDtypeStruct((N, F), jnp.float32),
        grid=grid,
        in_specs=[
            pl.BlockSpec((TN * P, K), lambda i: (i, 0)),      # patches slab (bf16)
            pl.BlockSpec((TN, A), lambda i: (i, 0)),          # audio slab (bf16)
            pl.BlockSpec((K, F), lambda i: (0, 0)),           # conv weight (bf16)
            pl.BlockSpec((1, F), lambda i: (0, 0)),           # conv bias (f32)
            pl.BlockSpec((F, F), lambda i: (0, 0)),           # folded video W (bf16)
            pl.BlockSpec((A, F), lambda i: (0, 0)),           # folded audio W (bf16)
            pl.BlockSpec((1, F), lambda i: (0, 0)),           # folded bias (f32)
        ],
        out_specs=pl.BlockSpec((TN, F), lambda i: (i, 0)),    # lane-dense slab
        compiler_params=pltpu.CompilerParams(
            dimension_semantics=("parallel",),
            vmem_limit_bytes=32 * 1024 * 1024),
    )(patches_f, audio_f,
      kparams["wc"], kparams["bc"],
      kparams["w1"], kparams["w2"], kparams["bfold"])

    return out.reshape(B, T, F)


# ---------------------------------------------------------------------------
# Deterministic parameter construction (PyTorch-style shapes, synthetic init)
# ---------------------------------------------------------------------------
def make_params(key, feature_dim, audio_dim):
    F, A, Cin = feature_dim, audio_dim, 3
    ks = jax.random.split(key, 8)

    def uni(k, shape, fan_in):
        b = 1.0 / np.sqrt(fan_in)
        return jax.random.uniform(k, shape, jnp.float32, -b, b)

    # Conv3d weight in PyTorch layout (F, Cin, kT, kH, kW)
    return dict(
        wconv=uni(ks[0], (F, Cin, 3, 3, 3), Cin * 27),
        bconv=uni(ks[1], (F,), Cin * 27),
        Wfc=uni(ks[2], (F, F), F), bfc=uni(ks[3], (F,), F),        # nn.Linear (out,in)
        Wa=uni(ks[4], (F, A), A), ba=uni(ks[5], (F,), A),
        Wf=uni(ks[6], (F, 2 * F), 2 * F), bf=uni(ks[7], (F,), 2 * F),
    )


def prepare_kernel_params(p):
    """Fold the bias-only linear chain (in f32) and cast matmul weights to bf16."""
    F = p["bconv"].shape[0]
    Cin = p["wconv"].shape[1]

    wc = jnp.transpose(p["wconv"], (2, 3, 4, 1, 0)).reshape(27 * Cin, F)
    wfc = p["Wfc"].T                          # (F, F)  x @ wfc
    wa = p["Wa"].T                            # (A, F)
    wfv = p["Wf"][:, :F].T                    # (F, F)
    wfa = p["Wf"][:, F:].T                    # (F, F)

    w1 = wfc @ wfv                                                  # (F, F)
    w2 = wa @ wfa                                                   # (A, F)
    bfold = (p["bfc"].reshape(1, F) @ wfv
             + p["ba"].reshape(1, F) @ wfa
             + p["bf"].reshape(1, F))                               # (1, F)

    return dict(
        wc=wc.astype(jnp.bfloat16),
        bc=p["bconv"].reshape(1, F).astype(jnp.float32),
        w1=w1.astype(jnp.bfloat16),
        w2=w2.astype(jnp.bfloat16),
        bfold=bfold.astype(jnp.float32),
    )


# ---------------------------------------------------------------------------
# Pure-JAX f32 reference (original unfolded chain) for validation
# ---------------------------------------------------------------------------
def reference(video, audio, p):
    B, T = video.shape[:2]
    A = audio.shape[-1]
    F = p["bconv"].shape[0]
    Cin = p["wconv"].shape[1]

    video_cl = jnp.transpose(video, (0, 1, 3, 4, 2))
    patches, _ = im2col_3d(video_cl)
    N = B * T
    patches = patches.reshape(N, -1, patches.shape[-1]).astype(jnp.float32)

    wc = jnp.transpose(p["wconv"], (2, 3, 4, 1, 0)).reshape(27 * Cin, F)
    conv = jnp.maximum(patches @ wc + p["bconv"].reshape(1, F), 0.0)
    pooled = conv.mean(axis=1)                                   # (N, F)
    v = pooled @ p["Wfc"].T + p["bfc"]
    a = audio.reshape(N, A) @ p["Wa"].T + p["ba"]
    out = jnp.concatenate([v, a], axis=-1) @ p["Wf"].T + p["bf"]
    return out.reshape(B, T, F)


if __name__ == "__main__":
    B, T, IMG, FEAT, AUD = 2, 8, 16, 128, 78      # module defaults for F / A
    key = jax.random.PRNGKey(0)
    kv, ka, kp = jax.random.split(key, 3)

    video = jax.random.normal(kv, (B, T, 3, IMG, IMG), jnp.float32)
    audio = jax.random.normal(ka, (B, T, AUD), jnp.float32)
    torch_params = make_params(kp, FEAT, AUD)
    kparams = prepare_kernel_params(torch_params)

    out = speaker_behaviour_encoder(video, audio, kparams)
    out = jax.block_until_ready(out)

    ref = reference(video, audio, torch_params)
    assert out.shape == (B, T, FEAT), out.shape
    # bf16 MXU operands -> relaxed tolerance vs the f32 reference
    max_err = float(np.max(np.abs(np.asarray(out) - np.asarray(ref))))
    assert np.allclose(np.asarray(out), np.asarray(ref), atol=2e-2, rtol=2e-2), max_err

    print("KERNEL_OK")
</pallas_src>

<mosaic_0001>
module attributes {stable_mosaic.version = 11 : i64} {
  func.func @sbe_kernel(%arg0: i32, %arg1: memref<512x81xbf16, #tpu.memory_space<vmem>>, %arg2: memref<8x78xbf16, #tpu.memory_space<vmem>>, %arg3: memref<81x128xbf16, #tpu.memory_space<vmem>>, %arg4: memref<1x128xf32, #tpu.memory_space<vmem>>, %arg5: memref<128x128xbf16, #tpu.memory_space<vmem>>, %arg6: memref<78x128xbf16, #tpu.memory_space<vmem>>, %arg7: memref<1x128xf32, #tpu.memory_space<vmem>>, %arg8: memref<8x128xf32, #tpu.memory_space<vmem>>) attributes {dimension_semantics = [#tpu.dimension_semantics<parallel>], iteration_bounds = array<i64: 2>, scalar_prefetch = 0 : i64, scratch_operands = 0 : i64, tpu.core_type = #tpu.core_type<tc>, window_params = [{transform_indices = @transform_0, window_bounds = array<i64: 512, 81>}, {transform_indices = @transform_1, window_bounds = array<i64: 8, 78>}, {pipeline_mode = #tpu.pipeline_mode<synchronous>, transform_indices = @transform_2, window_bounds = array<i64: 81, 128>}, {pipeline_mode = #tpu.pipeline_mode<synchronous>, transform_indices = @transform_3, window_bounds = array<i64: 1, 128>}, {pipeline_mode = #tpu.pipeline_mode<synchronous>, transform_indices = @transform_4, window_bounds = array<i64: 128, 128>}, {pipeline_mode = #tpu.pipeline_mode<synchronous>, transform_indices = @transform_5, window_bounds = array<i64: 78, 128>}, {pipeline_mode = #tpu.pipeline_mode<synchronous>, transform_indices = @transform_6, window_bounds = array<i64: 1, 128>}, {transform_indices = @transform_7, window_bounds = array<i64: 8, 128>}]} {
    %c0 = arith.constant 0 : index
    %c0_0 = arith.constant 0 : index
    %0 = vector.load %arg1[%c0, %c0_0] : memref<512x81xbf16, #tpu.memory_space<vmem>>, vector<512x81xbf16>
    %c0_1 = arith.constant 0 : index
    %c0_2 = arith.constant 0 : index
    %1 = vector.load %arg3[%c0_1, %c0_2] : memref<81x128xbf16, #tpu.memory_space<vmem>>, vector<81x128xbf16>
    %cst = arith.constant dense<0.000000e+00> : vector<512x128xf32>
    %2 = tpu.matmul %0, %1, %cst {dimension_numbers = #tpu.dot_dimension_numbers<[1], [0], [0], [1], [0, 0, 1, 1], [], []>} : vector<512x81xbf16>, vector<81x128xbf16>, vector<512x128xf32> -> vector<512x128xf32>
    %c0_3 = arith.constant 0 : index
    %c0_4 = arith.constant 0 : index
    %3 = vector.load %arg4[%c0_3, %c0_4] : memref<1x128xf32, #tpu.memory_space<vmem>>, vector<1x128xf32>
    %4 = vector.broadcast %3 : vector<1x128xf32> to vector<512x128xf32>
    %5 = arith.addf %2, %4 : vector<512x128xf32>
    %cst_5 = arith.constant 0.000000e+00 : f32
    %6 = vector.broadcast %cst_5 : f32 to vector<512x128xf32>
    %7 = arith.maximumf %5, %6 : vector<512x128xf32>
    %8 = vector.shape_cast %7 : vector<512x128xf32> to vector<8x64x128xf32>
    %cst_6 = arith.constant dense<0.000000e+00> : vector<8x128xf32>
    %9 = vector.multi_reduction <add>, %8, %cst_6 [1] : vector<8x64x128xf32> to vector<8x128xf32>
    %cst_7 = arith.constant 6.400000e+01 : f32
    %10 = vector.broadcast %cst_7 : f32 to vector<8x128xf32>
    %11 = arith.divf %9, %10 : vector<8x128xf32>
    %12 = arith.truncf %11 : vector<8x128xf32> to vector<8x128xbf16>
    %c0_8 = arith.constant 0 : index
    %c0_9 = arith.constant 0 : index
    %13 = vector.load %arg5[%c0_8, %c0_9] : memref<128x128xbf16, #tpu.memory_space<vmem>>, vector<128x128xbf16>
    %cst_10 = arith.constant dense<0.000000e+00> : vector<8x128xf32>
    %14 = tpu.matmul %12, %13, %cst_10 {dimension_numbers = #tpu.dot_dimension_numbers<[1], [0], [0], [1], [0, 0, 1, 1], [], []>} : vector<8x128xbf16>, vector<128x128xbf16>, vector<8x128xf32> -> vector<8x128xf32>
    %c0_11 = arith.constant 0 : index
    %c0_12 = arith.constant 0 : index
    %15 = vector.load %arg2[%c0_11, %c0_12] : memref<8x78xbf16, #tpu.memory_space<vmem>>, vector<8x78xbf16>
    %c0_13 = arith.constant 0 : index
    %c0_14 = arith.constant 0 : index
    %16 = vector.load %arg6[%c0_13, %c0_14] : memref<78x128xbf16, #tpu.memory_space<vmem>>, vector<78x128xbf16>
    %cst_15 = arith.constant dense<0.000000e+00> : vector<8x128xf32>
    %17 = tpu.matmul %15, %16, %cst_15 {dimension_numbers = #tpu.dot_dimension_numbers<[1], [0], [0], [1], [0, 0, 1, 1], [], []>} : vector<8x78xbf16>, vector<78x128xbf16>, vector<8x128xf32> -> vector<8x128xf32>
    %18 = arith.addf %14, %17 : vector<8x128xf32>
    %c0_16 = arith.constant 0 : index
    %c0_17 = arith.constant 0 : index
    %19 = vector.load %arg7[%c0_16, %c0_17] : memref<1x128xf32, #tpu.memory_space<vmem>>, vector<1x128xf32>
    %20 = vector.broadcast %19 : vector<1x128xf32> to vector<8x128xf32>
    %21 = arith.addf %18, %20 : vector<8x128xf32>
    %c0_18 = arith.constant 0 : index
    %c0_19 = arith.constant 0 : index
    %22 = vector.load %arg8[%c0_18, %c0_19] : memref<8x128xf32, #tpu.memory_space<vmem>>, vector<8x128xf32>
    tpu.vector_store %arg8[%c0_18, %c0_19], %21 {strides = array<i32>} : memref<8x128xf32, #tpu.memory_space<vmem>>, vector<8x128xf32>,
    return
  }
  func.func @transform_0(%arg0: i32) -> (i32, i32) {
    %c0_i32 = arith.constant 0 : i32
    %c0_i32_0 = arith.constant 0 : i32
    return %arg0, %c0_i32 : i32, i32
  }
  func.func @transform_1(%arg0: i32) -> (i32, i32) {
    %c0_i32 = arith.constant 0 : i32
    %c0_i32_0 = arith.constant 0 : i32
    return %arg0, %c0_i32 : i32, i32
  }
  func.func @transform_2(%arg0: i32) -> (i32, i32) {
    %c0_i32 = arith.constant 0 : i32
    %c0_i32_0 = arith.constant 0 : i32
    %c0_i32_1 = arith.constant 0 : i32
    return %c0_i32, %c0_i32_0 : i32, i32
  }
  func.func @transform_3(%arg0: i32) -> (i32, i32) {
    %c0_i32 = arith.constant 0 : i32
    %c0_i32_0 = arith.constant 0 : i32
    %c0_i32_1 = arith.constant 0 : i32
    return %c0_i32, %c0_i32_0 : i32, i32
  }
  func.func @transform_4(%arg0: i32) -> (i32, i32) {
    %c0_i32 = arith.constant 0 : i32
    %c0_i32_0 = arith.constant 0 : i32
    %c0_i32_1 = arith.constant 0 : i32
    return %c0_i32, %c0_i32_0 : i32, i32
  }
  func.func @transform_5(%arg0: i32) -> (i32, i32) {
    %c0_i32 = arith.constant 0 : i32
    %c0_i32_0 = arith.constant 0 : i32
    %c0_i32_1 = arith.constant 0 : i32
    return %c0_i32, %c0_i32_0 : i32, i32
  }
  func.func @transform_6(%arg0: i32) -> (i32, i32) {
    %c0_i32 = arith.constant 0 : i32
    %c0_i32_0 = arith.constant 0 : i32
    %c0_i32_1 = arith.constant 0 : i32
    return %c0_i32, %c0_i32_0 : i32, i32
  }
  func.func @transform_7(%arg0: i32) -> (i32, i32) {
    %c0_i32 = arith.constant 0 : i32
    %c0_i32_0 = arith.constant 0 : i32
    return %arg0, %c0_i32 : i32, i32
  }
}

</mosaic_0001>

<llo_original>
// kernel: tpu_custom_call.1
$region0: #{tpu_custom_call.1}
  #allocation0 [shape = 'u32[]', space=smem, size = 0x4, offset = 0x4, fixed_abs, tag = 'smem constant byte address 0x4 - core index']
  #allocation1 [shape = 'u32[72,128]{1,0:T(1,128)}', space=vmem, size = 0x9000, scoped, tag = 'internal scratch']
  %s0 = inlined_call_operand.vmem [shape: bf16[1024,81], index: 0, kind: input, shape index: {}]
  %s1 = inlined_call_operand.vmem [shape: bf16[16,78], index: 1, kind: input, shape index: {}]
  %s2 = inlined_call_operand.vmem [shape: bf16[81,128], index: 2, kind: input, shape index: {}]
  %s3 = inlined_call_operand.vmem [shape: f32[1,128], index: 3, kind: input, shape index: {}]
  %s4 = inlined_call_operand.vmem [shape: bf16[128,128], index: 4, kind: input, shape index: {}]
  %s5 = inlined_call_operand.vmem [shape: bf16[78,128], index: 5, kind: input, shape index: {}]
  %s6 = inlined_call_operand.vmem [shape: f32[1,128], index: 6, kind: input, shape index: {}]
  %s7 = inlined_call_operand.hbm [shape: f32[16,128], index: 7, kind: output, shape index: {}]
  %s8 = sld [smem:[#allocation0]]
  $region61: #{tpu_custom_call.1} parent=0
    _
  %s10 = ssub.s32 1, %s8
  %s11 = scalar_select 0, %s10, %s8
  $region1: #{tpu_custom_call.1} parent=0
    #allocation2 [shape = 'u8[8192]{0}', space=vmem, size = 0x2000, scoped, tag = 'output window, operand 0']
    #allocation3 [shape = 's32[2]{0}', space=sflag, size = 0x8, scoped, tag = 'scoped memory for tpu_custom_call.1']
    %12 = vsyncpa [#allocation3], 0
    %s13 = scalar_lea.sflag [#allocation3], 1
    %14 = vsyncpa %s13, 0
    loop: start=0, step=1, limit=4
    $region2: #{tpu_custom_call.1} parent=1 // loop_pre_header
      _
    $region3: #{tpu_custom_call.1} parent=1 // loop_header
      %s16 = sphi 0, %s20
      %p17 = scmp.ge.s32.totalorder %s16, 4
      %s26 = sphi 0, %s28
      %s29 = sphi 0, %s26
      %s30 = sphi 0, %s29
      %s46 = sphi 0, %s30
      %s52 = sphi 0, %s54
      %s55 = sphi 0, %s52
      %s56 = sphi 0, %s55
      %s72 = sphi 0, %s56
      %s76 = sphi 0, %s76
      %s78 = sphi 0, %s76
      %s79 = sphi 0, %s78
      %s93 = sphi 0, %s79
      %s97 = sphi 0, %s97
      %s99 = sphi 0, %s97
      %s100 = sphi 0, %s99
      %s114 = sphi 0, %s100
      %s118 = sphi 0, %s118
      %s120 = sphi 0, %s118
      %s121 = sphi 0, %s120
      %s135 = sphi 0, %s121
      %s139 = sphi 0, %s139
      %s141 = sphi 0, %s139
      %s142 = sphi 0, %s141
      %s156 = sphi 0, %s142
      %s160 = sphi 0, %s160
      %s162 = sphi 0, %s160
      %s163 = sphi 0, %s162
      %s177 = sphi 0, %s163
      %s183 = sphi 0, %s185
      %s186 = sphi 0, %s183
      %s187 = sphi 0, %s186
      %s203 = sphi 0, %s187
    $region4: #{tpu_custom_call.1} parent=1 // loop_header_branch
      %19 = sbr.rel (%p17) target = $region8
    $region5: #{tpu_custom_call.1} parent=1 // loop_body
      %s21 = ssub.s32 %s16, 1
      %s22 = ssub.s32 %s16, 2
      %s23 = sadd.s32 %s16, 1
      %s24 = ssub.s32 %s16, %s23
      %p25 = scmp.eq.s32.totalorder %s24, 0
      %s27 = sadd.s32 %s26, 1
      %s28 = scalar_select %p25, %s26, %s27
      %p31 = pneg %p25
      %p32 = scmp.eq.s32.totalorder %s16, 1
      %p33 = por %p31, %p32
      %p34 = scmp.ne.s32.totalorder %s26, %s29
      %p35 = scmp.eq.s32.totalorder %s16, 0
      %p36 = por %p34, %p35
      %p37 = scmp.ne.s32.totalorder %s26, %s29
      %p38 = scmp.eq.s32.totalorder %s21, 1
      %p39 = por %p37, %p38
      %p40 = scmp.ne.s32.totalorder %s29, %s30
      %p41 = scmp.eq.s32.totalorder %s21, 0
      %p42 = por %p40, %p41
      %p43 = scmp.ne.s32.totalorder %s29, %s30
      %p44 = scmp.eq.s32.totalorder %s22, 1
      %p45 = por %p43, %p44
      %p47 = scmp.ne.s32.totalorder %s30, %s46
      %p48 = scmp.eq.s32.totalorder %s22, 0
      %p49 = por %p47, %p48
      %s50 = ssub.s32 %s16, %s23
      %p51 = scmp.eq.s32.totalorder %s50, 0
      %s53 = sadd.s32 %s52, 1
      %s54 = scalar_select %p51, %s52, %s53
      %p57 = pneg %p51
      %p58 = scmp.eq.s32.totalorder %s16, 1
      %p59 = por %p57, %p58
      %p60 = scmp.ne.s32.totalorder %s52, %s55
      %p61 = scmp.eq.s32.totalorder %s16, 0
      %p62 = por %p60, %p61
      %p63 = scmp.ne.s32.totalorder %s52, %s55
      %p64 = scmp.eq.s32.totalorder %s21, 1
      %p65 = por %p63, %p64
      %p66 = scmp.ne.s32.totalorder %s55, %s56
      %p67 = scmp.eq.s32.totalorder %s21, 0
      %p68 = por %p66, %p67
      %p69 = scmp.ne.s32.totalorder %s55, %s56
      %p70 = scmp.eq.s32.totalorder %s22, 1
      %p71 = por %p69, %p70
      %p73 = scmp.ne.s32.totalorder %s56, %s72
      %p74 = scmp.eq.s32.totalorder %s22, 0
      %p75 = por %p73, %p74
      %s77 = sadd.s32 %s76, 1
      %p80 = scmp.eq.s32.totalorder %s16, 1
      %p81 = scmp.ne.s32.totalorder %s76, %s78
      %p82 = scmp.eq.s32.totalorder %s16, 0
      %p83 = por %p81, %p82
      %p84 = scmp.ne.s32.totalorder %s76, %s78
      %p85 = scmp.eq.s32.totalorder %s21, 1
      %p86 = por %p84, %p85
      %p87 = scmp.ne.s32.totalorder %s78, %s79
      %p88 = scmp.eq.s32.totalorder %s21, 0
      %p89 = por %p87, %p88
      %p90 = scmp.ne.s32.totalorder %s78, %s79
      %p91 = scmp.eq.s32.totalorder %s22, 1
      %p92 = por %p90, %p91
      %p94 = scmp.ne.s32.totalorder %s79, %s93
      %p95 = scmp.eq.s32.totalorder %s22, 0
      %p96 = por %p94, %p95
      %s98 = sadd.s32 %s97, 1
      %p101 = scmp.eq.s32.totalorder %s16, 1
      %p102 = scmp.ne.s32.totalorder %s97, %s99
      %p103 = scmp.eq.s32.totalorder %s16, 0
      %p104 = por %p102, %p103
      %p105 = scmp.ne.s32.totalorder %s97, %s99
      %p106 = scmp.eq.s32.totalorder %s21, 1
      %p107 = por %p105, %p106
      %p108 = scmp.ne.s32.totalorder %s99, %s100
      %p109 = scmp.eq.s32.totalorder %s21, 0
      %p110 = por %p108, %p109
      %p111 = scmp.ne.s32.totalorder %s99, %s100
      %p112 = scmp.eq.s32.totalorder %s22, 1
      %p113 = por %p111, %p112
      %p115 = scmp.ne.s32.totalorder %s100, %s114
      %p116 = scmp.eq.s32.totalorder %s22, 0
      %p117 = por %p115, %p116
      %s119 = sadd.s32 %s118, 1
      %p122 = scmp.eq.s32.totalorder %s16, 1
      %p123 = scmp.ne.s32.totalorder %s118, %s120
      %p124 = scmp.eq.s32.totalorder %s16, 0
      %p125 = por %p123, %p124
      %p126 = scmp.ne.s32.totalorder %s118, %s120
      %p127 = scmp.eq.s32.totalorder %s21, 1
      %p128 = por %p126, %p127
      %p129 = scmp.ne.s32.totalorder %s120, %s121
      %p130 = scmp.eq.s32.totalorder %s21, 0
      %p131 = por %p129, %p130
      %p132 = scmp.ne.s32.totalorder %s120, %s121
      %p133 = scmp.eq.s32.totalorder %s22, 1
      %p134 = por %p132, %p133
      %p136 = scmp.ne.s32.totalorder %s121, %s135
      %p137 = scmp.eq.s32.totalorder %s22, 0
      %p138 = por %p136, %p137
      %s140 = sadd.s32 %s139, 1
      %p143 = scmp.eq.s32.totalorder %s16, 1
      %p144 = scmp.ne.s32.totalorder %s139, %s141
      %p145 = scmp.eq.s32.totalorder %s16, 0
      %p146 = por %p144, %p145
      %p147 = scmp.ne.s32.totalorder %s139, %s141
      %p148 = scmp.eq.s32.totalorder %s21, 1
      %p149 = por %p147, %p148
      %p150 = scmp.ne.s32.totalorder %s141, %s142
      %p151 = scmp.eq.s32.totalorder %s21, 0
      %p152 = por %p150, %p151
      %p153 = scmp.ne.s32.totalorder %s141, %s142
      %p154 = scmp.eq.s32.totalorder %s22, 1
      %p155 = por %p153, %p154
      %p157 = scmp.ne.s32.totalorder %s142, %s156
      %p158 = scmp.eq.s32.totalorder %s22, 0
      %p159 = por %p157, %p158
      %s161 = sadd.s32 %s160, 1
      %p164 = scmp.eq.s32.totalorder %s16, 1
      %p165 = scmp.ne.s32.totalorder %s160, %s162
      %p166 = scmp.eq.s32.totalorder %s16, 0
      %p167 = por %p165, %p166
      %p168 = scmp.ne.s32.totalorder %s160, %s162
      %p169 = scmp.eq.s32.totalorder %s21, 1
      %p170 = por %p168, %p169
      %p171 = scmp.ne.s32.totalorder %s162, %s163
      %p172 = scmp.eq.s32.totalorder %s21, 0
      %p173 = por %p171, %p172
      %p174 = scmp.ne.s32.totalorder %s162, %s163
      %p175 = scmp.eq.s32.totalorder %s22, 1
      %p176 = por %p174, %p175
      %p178 = scmp.ne.s32.totalorder %s163, %s177
      %p179 = scmp.eq.s32.totalorder %s22, 0
      %p180 = por %p178, %p179
      %s181 = ssub.s32 %s16, %s23
      %p182 = scmp.eq.s32.totalorder %s181, 0
      %s184 = sadd.s32 %s183, 1
      %s185 = scalar_select %p182, %s183, %s184
      %p188 = pneg %p182
      %p189 = scmp.eq.s32.totalorder %s16, 1
      %p190 = por %p188, %p189
      %p191 = scmp.ne.s32.totalorder %s183, %s186
      %p192 = scmp.eq.s32.totalorder %s16, 0
      %p193 = por %p191, %p192
      %p194 = scmp.ne.s32.totalorder %s183, %s186
      %p195 = scmp.eq.s32.totalorder %s21, 1
      %p196 = por %p194, %p195
      %p197 = scmp.ne.s32.totalorder %s186, %s187
      %p198 = scmp.eq.s32.totalorder %s21, 0
      %p199 = por %p197, %p198
      %p200 = scmp.ne.s32.totalorder %s186, %s187
      %p201 = scmp.eq.s32.totalorder %s22, 1
      %p202 = por %p200, %p201
      %p204 = scmp.ne.s32.totalorder %s187, %s203
      %p205 = scmp.eq.s32.totalorder %s22, 0
      %p206 = por %p204, %p205
      %p207 = scmp.le.s32.totalorder 1, %s16
      %p208 = scmp.lt.s32.totalorder %s16, 3
      %p209 = pnand %p207, %p208
      %p210 = pneg %p209
      // Predicated region
      $region9: #{tpu_custom_call.1} parent=5 // pred_check
        _
      $region10: #{tpu_custom_call.1} parent=5 // pred_check_branch
        %212 = sbr.rel (%p209) target = $region12
      $region11: #{tpu_custom_call.1} parent=5 // pred_region
        %s213 = ssub.s32 %s16, 1
        // Predicated region
        $region13: #{tpu_custom_call.1} parent=11 // pred_check
          %p214 = pneg %p89
        $region14: #{tpu_custom_call.1} parent=11 // pred_check_branch
          %216 = sbr.rel (%p214) target = $region16
        $region15: #{tpu_custom_call.1} parent=11 // pred_region
          _
        $region16: #{tpu_custom_call.1} parent=11 // pred_fallthru
          _
        // Predicated region
        $region17: #{tpu_custom_call.1} parent=11 // pred_check
          %p217 = pneg %p110
        $region18: #{tpu_custom_call.1} parent=11 // pred_check_branch
          %219 = sbr.rel (%p217) target = $region20
        $region19: #{tpu_custom_call.1} parent=11 // pred_region
          _
        $region20: #{tpu_custom_call.1} parent=11 // pred_fallthru
          _
        // Predicated region
        $region21: #{tpu_custom_call.1} parent=11 // pred_check
          %p220 = pneg %p131
        $region22: #{tpu_custom_call.1} parent=11 // pred_check_branch
          %222 = sbr.rel (%p220) target = $region24
        $region23: #{tpu_custom_call.1} parent=11 // pred_region
          _
        $region24: #{tpu_custom_call.1} parent=11 // pred_fallthru
          _
        // Predicated region
        $region25: #{tpu_custom_call.1} parent=11 // pred_check
          %p223 = pneg %p152
        $region26: #{tpu_custom_call.1} parent=11 // pred_check_branch
          %225 = sbr.rel (%p223) target = $region28
        $region27: #{tpu_custom_call.1} parent=11 // pred_region
          _
        $region28: #{tpu_custom_call.1} parent=11 // pred_fallthru
          _
        // Predicated region
        $region29: #{tpu_custom_call.1} parent=11 // pred_check
          %p226 = pneg %p173
        $region30: #{tpu_custom_call.1} parent=11 // pred_check_branch
          %228 = sbr.rel (%p226) target = $region32
        $region31: #{tpu_custom_call.1} parent=11 // pred_region
          _
        $region32: #{tpu_custom_call.1} parent=11 // pred_fallthru
          _
      $region12: #{tpu_custom_call.1} parent=5 // pred_fallthru
        _
      %p229 = scmp.lt.s32.totalorder %s16, 2
      // Predicated region
      $region33: #{tpu_custom_call.1} parent=5 // pred_check
        %p230 = pneg %p229
      $region34: #{tpu_custom_call.1} parent=5 // pred_check_branch
        %232 = sbr.rel (%p230) target = $region36
      $region35: #{tpu_custom_call.1} parent=5 // pred_region
        // Predicated region
        $region37: #{tpu_custom_call.1} parent=35 // pred_check
          %p233 = pneg %p36
        $region38: #{tpu_custom_call.1} parent=35 // pred_check_branch
          %235 = sbr.rel (%p233) target = $region40
        $region39: #{tpu_custom_call.1} parent=35 // pred_region
          %s236 = smul.u32 64, %s16
          %p237 = scmp.lt.s32.totalorder %s236, 127
          %s238 = scalar_select %p237, %s236, 127
          %s239 = smul.addr %s238, 4
          %s240 = scalar_lea.vmem %s0, %s239
          %s241 = smul.u32 64, %s16
        $region40: #{tpu_custom_call.1} parent=35 // pred_fallthru
          _
        // Predicated region
        $region41: #{tpu_custom_call.1} parent=35 // pred_check
          %p242 = pneg %p62
        $region42: #{tpu_custom_call.1} parent=35 // pred_check_branch
          %244 = sbr.rel (%p242) target = $region44
        $region43: #{tpu_custom_call.1} parent=35 // pred_region
          %p245 = scmp.lt.s32.totalorder %s16, 1
          %s246 = scalar_select %p245, %s16, 1
          %s247 = smul.addr %s246, 4
          %s248 = scalar_lea.vmem %s1, %s247
        $region44: #{tpu_custom_call.1} parent=35 // pred_fallthru
          _
      $region36: #{tpu_custom_call.1} parent=5 // pred_fallthru
        _
      %p249 = scmp.le.s32.totalorder 1, %s16
      %p250 = scmp.lt.s32.totalorder %s16, 3
      %p251 = pnand %p249, %p250
      %p252 = pneg %p251
      // Predicated region
      $region45: #{tpu_custom_call.1} parent=5 // pred_check
        _
      $region46: #{tpu_custom_call.1} parent=5 // pred_check_branch
        %254 = sbr.rel (%p251) target = $region48
      $region47: #{tpu_custom_call.1} parent=5 // pred_region
        %s255 = ssub.s32 %s16, 1
        %s256 = smul.u32 64, %s21
        %p257 = scmp.lt.s32.totalorder %s256, 127
        %s258 = scalar_select %p257, %s256, 127
        %s259 = smul.addr %s258, 4
        %s260 = scalar_lea.vmem %s0, %s259
        %p261 = pneg %p42
        %p262 = pneg %p39
        %p263 = scmp.lt.s32.totalorder %s21, 1
        %s264 = scalar_select %p263, %s21, 1
        %s265 = smul.addr %s264, 4
        %s266 = scalar_lea.vmem %s1, %s265
        %p267 = pneg %p68
        %p268 = pneg %p65
        %p269 = pneg %p89
        %p270 = pneg %p86
        %p271 = pneg %p110
        %p272 = pneg %p107
        %p273 = pneg %p131
        %p274 = pneg %p128
        %p275 = pneg %p152
        %p276 = pneg %p149
        %p277 = pneg %p173
        %p278 = pneg %p170
        %p279 = pneg %p199
        %p280 = pneg %p196
        %s281 = sand.u32 %s186, 1
        %s282 = scalar_lea.sflag [#allocation3], %s281
        %s283 = sand.u32 %s186, 1
        %s284 = smul.addr %s283, 8
        %s285 = scalar_lea.vmem [#allocation2], %s284
        %s286 = smul.u32 64, %s21
        %p287 = scmp.lt.s32.totalorder %s286, 127
        %s288 = scalar_select %p287, %s286, 127
        %s289 = smul.addr %s288, 4
        %s290 = scalar_lea.vmem %s0, %s289
        %s291 = smul.u32 64, %s21
        %p292 = scmp.lt.s32.totalorder %s21, 1
        %s293 = scalar_select %p292, %s21, 1
        %s294 = smul.addr %s293, 4
        %s295 = scalar_lea.vmem %s1, %s294
        %v297 = vld [vmem:[%s290] sm:$0xf]
        %v298 = vld [vmem:[%s290 + $0x4] sm:$0xf]
        %v299 = vld [vmem:[%s290 + $0x8] sm:$0xf]
        %v300 = vld [vmem:[%s290 + $0xc] sm:$0xf]
        %v301 = vld [vmem:[%s290 + $0x10] sm:$0xf]
        %v302 = vld [vmem:[%s290 + $0x14] sm:$0xf]
        %v303 = vld [vmem:[%s290 + $0x18] sm:$0xf]
        %v304 = vld [vmem:[%s290 + $0x1c] sm:$0xf]
        %v305 = vld [vmem:[%s290 + $0x20] sm:$0xf]
        %v306 = vld [vmem:[%s290 + $0x24] sm:$0xf]
        %v307 = vld [vmem:[%s290 + $0x28] sm:$0xf]
        %v308 = vld [vmem:[%s290 + $0x2c] sm:$0xf]
        %v309 = vld [vmem:[%s290 + $0x30] sm:$0xf]
        %v310 = vld [vmem:[%s290 + $0x34] sm:$0xf]
        %v311 = vld [vmem:[%s290 + $0x38] sm:$0xf]
        %v312 = vld [vmem:[%s290 + $0x3c] sm:$0xf]
        %v313 = vld [vmem:[%s290 + $0x40] sm:$0xf]
        %v314 = vld [vmem:[%s290 + $0x44] sm:$0xf]
        %v315 = vld [vmem:[%s290 + $0x48] sm:$0xf]
        %v316 = vld [vmem:[%s290 + $0x4c] sm:$0xf]
        %v317 = vld [vmem:[%s290 + $0x50] sm:$0xf]
        %v318 = vld [vmem:[%s290 + $0x54] sm:$0xf]
        %v319 = vld [vmem:[%s290 + $0x58] sm:$0xf]
        %v320 = vld [vmem:[%s290 + $0x5c] sm:$0xf]
        %v321 = vld [vmem:[%s290 + $0x60] sm:$0xf]
        %v322 = vld [vmem:[%s290 + $0x64] sm:$0xf]
        %v323 = vld [vmem:[%s290 + $0x68] sm:$0xf]
        %v324 = vld [vmem:[%s290 + $0x6c] sm:$0xf]
        %v325 = vld [vmem:[%s290 + $0x70] sm:$0xf]
        %v326 = vld [vmem:[%s290 + $0x74] sm:$0xf]
        %v327 = vld [vmem:[%s290 + $0x78] sm:$0xf]
        %v328 = vld [vmem:[%s290 + $0x7c] sm:$0xf]
        %v329 = vld [vmem:[%s290 + $0x80] sm:$0xf]
        %v330 = vld [vmem:[%s290 + $0x84] sm:$0xf]
        %v331 = vld [vmem:[%s290 + $0x88] sm:$0xf]
        %v332 = vld [vmem:[%s290 + $0x8c] sm:$0xf]
        %v333 = vld [vmem:[%s290 + $0x90] sm:$0xf]
        %v334 = vld [vmem:[%s290 + $0x94] sm:$0xf]
        %v335 = vld [vmem:[%s290 + $0x98] sm:$0xf]
        %v336 = vld [vmem:[%s290 + $0x9c] sm:$0xf]
        %v337 = vld [vmem:[%s290 + $0xa0] sm:$0xf]
        %v338 = vld [vmem:[%s290 + $0xa4] sm:$0xf]
        %v339 = vld [vmem:[%s290 + $0xa8] sm:$0xf]
        %v340 = vld [vmem:[%s290 + $0xac] sm:$0xf]
        %v341 = vld [vmem:[%s290 + $0xb0] sm:$0xf]
        %v342 = vld [vmem:[%s290 + $0xb4] sm:$0xf]
        %v343 = vld [vmem:[%s290 + $0xb8] sm:$0xf]
        %v344 = vld [vmem:[%s290 + $0xbc] sm:$0xf]
        %v345 = vld [vmem:[%s290 + $0xc0] sm:$0xf]
        %v346 = vld [vmem:[%s290 + $0xc4] sm:$0xf]
        %v347 = vld [vmem:[%s290 + $0xc8] sm:$0xf]
        %v348 = vld [vmem:[%s290 + $0xcc] sm:$0xf]
        %v349 = vld [vmem:[%s290 + $0xd0] sm:$0xf]
        %v350 = vld [vmem:[%s290 + $0xd4] sm:$0xf]
        %v351 = vld [vmem:[%s290 + $0xd8] sm:$0xf]
        %v352 = vld [vmem:[%s290 + $0xdc] sm:$0xf]
        %v353 = vld [vmem:[%s290 + $0xe0] sm:$0xf]
        %v354 = vld [vmem:[%s290 + $0xe4] sm:$0xf]
        %v355 = vld [vmem:[%s290 + $0xe8] sm:$0xf]
        %v356 = vld [vmem:[%s290 + $0xec] sm:$0xf]
        %v357 = vld [vmem:[%s290 + $0xf0] sm:$0xf]
        %v358 = vld [vmem:[%s290 + $0xf4] sm:$0xf]
        %v359 = vld [vmem:[%s290 + $0xf8] sm:$0xf]
        %v360 = vld [vmem:[%s290 + $0xfc] sm:$0xf]
        %v361 = vld [vmem:[%s2] sm:$0xf]
        %v362 = vld [vmem:[%s2 + $0x4] sm:$0xf]
        %v363 = vld [vmem:[%s2 + $0x8] sm:$0xf]
        %v364 = vld [vmem:[%s2 + $0xc] sm:$0xf]
        %v365 = vld [vmem:[%s2 + $0x10] sm:$0xf]
        %v366 = vld [vmem:[%s2 + $0x14] sm:$0xf]
        %v367 = vld [vmem:[%s2 + $0x18] sm:$0xf]
        %v368 = vld [vmem:[%s2 + $0x1c] sm:$0xf]
        %v369 = vld [vmem:[%s2 + $0x20] sm:$0xf]
        %v370 = vld [vmem:[%s2 + $0x24] sm:$0xf]
        %v371 = vld [vmem:[%s2 + $0x28] sm:$0x1]
        %v372 = vld [vmem:[%s3] sm:$0x1]
        %v374 = vperm.slane %v372, 0
        %v440 = vunpack.c.l.b16 %v297
        %v441 = vunpack.c.l.b16 %v298
        %v442 = vunpack.c.l.b16 %v299
        %v443 = vunpack.c.l.b16 %v300
        %v444 = vunpack.c.l.b16 %v301
        %v445 = vunpack.c.l.b16 %v302
        %v446 = vunpack.c.l.b16 %v303
        %v447 = vunpack.c.l.b16 %v304
        %v448 = vunpack.c.l.b16 %v305
        %v449 = vunpack.c.l.b16 %v306
        %v450 = vunpack.c.l.b16 %v307
        %v451 = vunpack.c.l.b16 %v308
        %v452 = vunpack.c.l.b16 %v309
        %v453 = vunpack.c.l.b16 %v310
        %v454 = vunpack.c.l.b16 %v311
        %v455 = vunpack.c.l.b16 %v312
        %v456 = vunpack.c.l.b16 %v313
        %v457 = vunpack.c.l.b16 %v314
        %v458 = vunpack.c.l.b16 %v315
        %v459 = vunpack.c.l.b16 %v316
        %v460 = vunpack.c.l.b16 %v317
        %v461 = vunpack.c.l.b16 %v318
        %v462 = vunpack.c.l.b16 %v319
        %v463 = vunpack.c.l.b16 %v320
        %v464 = vunpack.c.l.b16 %v321
        %v465 = vunpack.c.l.b16 %v322
        %v466 = vunpack.c.l.b16 %v323
        %v467 = vunpack.c.l.b16 %v324
        %v468 = vunpack.c.l.b16 %v325
        %v469 = vunpack.c.l.b16 %v326
        %v470 = vunpack.c.l.b16 %v327
        %v471 = vunpack.c.l.b16 %v328
        %v472 = vunpack.c.l.b16 %v329
        %v473 = vunpack.c.l.b16 %v330
        %v474 = vunpack.c.l.b16 %v331
        %v475 = vunpack.c.l.b16 %v332
        %v476 = vunpack.c.l.b16 %v333
        %v477 = vunpack.c.l.b16 %v334
        %v478 = vunpack.c.l.b16 %v335
        %v479 = vunpack.c.l.b16 %v336
        %v480 = vunpack.c.l.b16 %v337
        %v481 = vunpack.c.l.b16 %v338
        %v482 = vunpack.c.l.b16 %v339
        %v483 = vunpack.c.l.b16 %v340
        %v484 = vunpack.c.l.b16 %v341
        %v485 = vunpack.c.l.b16 %v342
        %v486 = vunpack.c.l.b16 %v343
        %v487 = vunpack.c.l.b16 %v344
        %v488 = vunpack.c.l.b16 %v345
        %v489 = vunpack.c.l.b16 %v346
        %v490 = vunpack.c.l.b16 %v347
        %v491 = vunpack.c.l.b16 %v348
        %v492 = vunpack.c.l.b16 %v349
        %v493 = vunpack.c.l.b16 %v350
        %v494 = vunpack.c.l.b16 %v351
        %v495 = vunpack.c.l.b16 %v352
        %v496 = vunpack.c.l.b16 %v353
        %v497 = vunpack.c.l.b16 %v354
        %v498 = vunpack.c.l.b16 %v355
        %v499 = vunpack.c.l.b16 %v356
        %v500 = vunpack.c.l.b16 %v357
        %v501 = vunpack.c.l.b16 %v358
        %v502 = vunpack.c.l.b16 %v359
        %v503 = vunpack.c.l.b16 %v360
        %v504 = vpack.c.b16 %v441, %v440
        %v505 = vpack.c.b16 %v443, %v442
        %v506 = vpack.c.b16 %v445, %v444
        %v507 = vpack.c.b16 %v447, %v446
        %v508 = vpack.c.b16 %v449, %v448
        %v509 = vpack.c.b16 %v451, %v450
        %v510 = vpack.c.b16 %v453, %v452
        %v511 = vpack.c.b16 %v455, %v454
        %v512 = vpack.c.b16 %v457, %v456
        %v513 = vpack.c.b16 %v459, %v458
        %v514 = vpack.c.b16 %v461, %v460
        %v515 = vpack.c.b16 %v463, %v462
        %v516 = vpack.c.b16 %v465, %v464
        %v517 = vpack.c.b16 %v467, %v466
        %v518 = vpack.c.b16 %v469, %v468
        %v519 = vpack.c.b16 %v471, %v470
        %v520 = vpack.c.b16 %v473, %v472
        %v521 = vpack.c.b16 %v475, %v474
        %v522 = vpack.c.b16 %v477, %v476
        %v523 = vpack.c.b16 %v479, %v478
        %v524 = vpack.c.b16 %v481, %v480
        %v525 = vpack.c.b16 %v483, %v482
        %v526 = vpack.c.b16 %v485, %v484
        %v527 = vpack.c.b16 %v487, %v486
        %v528 = vpack.c.b16 %v489, %v488
        %v529 = vpack.c.b16 %v491, %v490
        %v530 = vpack.c.b16 %v493, %v492
        %v531 = vpack.c.b16 %v495, %v494
        %v532 = vpack.c.b16 %v497, %v496
        %v533 = vpack.c.b16 %v499, %v498
        %v534 = vpack.c.b16 %v501, %v500
        %v535 = vpack.c.b16 %v503, %v502
        %v547 = vunpack.c.l.b16 %v361
        %v548 = vunpack.c.l.b16 %v362
        %v549 = vunpack.c.l.b16 %v363
        %v550 = vunpack.c.l.b16 %v364
        %v551 = vunpack.c.l.b16 %v365
        %v552 = vunpack.c.l.b16 %v366
        %v553 = vunpack.c.l.b16 %v367
        %v554 = vunpack.c.l.b16 %v368
        %v555 = vunpack.c.l.b16 %v369
        %v556 = vunpack.c.l.b16 %v370
        %v557 = vunpack.c.l.b16 %v371
        %v558 = vpack.c.b16 %v548, %v547
        %v559 = vpack.c.b16 %v550, %v549
        %v560 = vpack.c.b16 %v552, %v551
        %v561 = vpack.c.b16 %v554, %v553
        %v562 = vpack.c.b16 %v556, %v555
        %v563 = vpack.c.b16 %v557, %v557
        %vm569 = vcmask 662528
        %v571 = vsel %vm569, %v504, 0
        %v574 = vsel %vm569, %v505, 0
        %v577 = vsel %vm569, %v506, 0
        %v580 = vsel %vm569, %v507, 0
        %v583 = vsel %vm569, %v508, 0
        %v586 = vsel %vm569, %v509, 0
        %v589 = vsel %vm569, %v510, 0
        %v592 = vsel %vm569, %v511, 0
        %v595 = vsel %vm569, %v512, 0
        %v598 = vsel %vm569, %v513, 0
        %v601 = vsel %vm569, %v514, 0
        %v604 = vsel %vm569, %v515, 0
        %v607 = vsel %vm569, %v516, 0
        %v610 = vsel %vm569, %v517, 0
        %v613 = vsel %vm569, %v518, 0
        %v616 = vsel %vm569, %v519, 0
        %v619 = vsel %vm569, %v520, 0
        %v622 = vsel %vm569, %v521, 0
        %v625 = vsel %vm569, %v522, 0
        %v628 = vsel %vm569, %v523, 0
        %v631 = vsel %vm569, %v524, 0
        %v634 = vsel %vm569, %v525, 0
        %v637 = vsel %vm569, %v526, 0
        %v640 = vsel %vm569, %v527, 0
        %v643 = vsel %vm569, %v528, 0
        %v646 = vsel %vm569, %v529, 0
        %v649 = vsel %vm569, %v530, 0
        %v652 = vsel %vm569, %v531, 0
        %v655 = vsel %vm569, %v532, 0
        %v658 = vsel %vm569, %v533, 0
        %v661 = vsel %vm569, %v534, 0
        %v664 = vsel %vm569, %v535, 0
        %vm666 = vcmask 1040384
        %v667 = vsel 0, 4294967295, 65535
        %v668 = vsel %vm666, %v667, 0
        %v670 = vand.u32 %v563, %v668
        %672 = vmatpush.bf16.msra.mxu0 0
        %673 = vmatpush.bf16.msra.mxu0 0
        %674 = vmatpush.bf16.msra.mxu0 %v670
        %675 = vmatpush.bf16.msra.mxu0 %v562
        %676 = vmatpush.bf16.msra.mxu0 %v561
        %677 = vmatpush.bf16.msra.mxu0 %v560
        %678 = vmatpush.bf16.msra.mxu0 %v559
        %679 = vmatpush.bf16.msra.mxu0 %v558
        %680 = vmatmul.bf16.gmra.mxu0 %v571
        %v681 = vpop.f32.mrf.mxu0
        %v682 = vadd.f32 %v374, %v681
        %v683 = vpop.f32.mrf.mxu0
        %v684 = vadd.f32 %v374, %v683
        %685 = vmatmul.bf16.gmra.mxu0 %v574
        %v686 = vpop.f32.mrf.mxu0
        %v687 = vadd.f32 %v374, %v686
        %v688 = vpop.f32.mrf.mxu0
        %v689 = vadd.f32 %v374, %v688
        %690 = vmatmul.bf16.gmra.mxu0 %v577
        %v691 = vpop.f32.mrf.mxu0
        %v692 = vadd.f32 %v374, %v691
        %v693 = vpop.f32.mrf.mxu0
        %v694 = vadd.f32 %v374, %v693
        %695 = vmatmul.bf16.gmra.mxu0 %v580
        %v696 = vpop.f32.mrf.mxu0
        %v697 = vadd.f32 %v374, %v696
        %v698 = vpop.f32.mrf.mxu0
        %v699 = vadd.f32 %v374, %v698
        %700 = vmatmul.bf16.gmra.mxu0 %v583
        %v701 = vpop.f32.mrf.mxu0
        %v702 = vadd.f32 %v374, %v701
        %v703 = vpop.f32.mrf.mxu0
        %v704 = vadd.f32 %v374, %v703
        %705 = vmatmul.bf16.gmra.mxu0 %v586
        %v706 = vpop.f32.mrf.mxu0
        %v707 = vadd.f32 %v374, %v706
        %v708 = vpop.f32.mrf.mxu0
        %v709 = vadd.f32 %v374, %v708
        %710 = vmatmul.bf16.gmra.mxu0 %v589
        %v711 = vpop.f32.mrf.mxu0
        %v712 = vadd.f32 %v374, %v711
        %v713 = vpop.f32.mrf.mxu0
        %v714 = vadd.f32 %v374, %v713
        %715 = vmatmul.bf16.gmra.mxu0 %v592
        %v716 = vpop.f32.mrf.mxu0
        %v717 = vadd.f32 %v374, %v716
        %v718 = vpop.f32.mrf.mxu0
        %v719 = vadd.f32 %v374, %v718
        %720 = vmatmul.bf16.gmra.mxu0 %v595
        %v721 = vpop.f32.mrf.mxu0
        %v722 = vadd.f32 %v374, %v721
        %v723 = vpop.f32.mrf.mxu0
        %v724 = vadd.f32 %v374, %v723
        %725 = vmatmul.bf16.gmra.mxu0 %v598
        %v726 = vpop.f32.mrf.mxu0
        %v727 = vadd.f32 %v374, %v726
        %v728 = vpop.f32.mrf.mxu0
        %v729 = vadd.f32 %v374, %v728
        %730 = vmatmul.bf16.gmra.mxu0 %v601
        %v731 = vpop.f32.mrf.mxu0
        %v732 = vadd.f32 %v374, %v731
        %v733 = vpop.f32.mrf.mxu0
        %v734 = vadd.f32 %v374, %v733
        %735 = vmatmul.bf16.gmra.mxu0 %v604
        %v736 = vpop.f32.mrf.mxu0
        %v737 = vadd.f32 %v374, %v736
        %v738 = vpop.f32.mrf.mxu0
        %v739 = vadd.f32 %v374, %v738
        %740 = vmatmul.bf16.gmra.mxu0 %v607
        %v741 = vpop.f32.mrf.mxu0
        %v742 = vadd.f32 %v374, %v741
        %v743 = vpop.f32.mrf.mxu0
        %v744 = vadd.f32 %v374, %v743
        %745 = vmatmul.bf16.gmra.mxu0 %v610
        %v746 = vpop.f32.mrf.mxu0
        %v747 = vadd.f32 %v374, %v746
        %v748 = vpop.f32.mrf.mxu0
        %v749 = vadd.f32 %v374, %v748
        %750 = vmatmul.bf16.gmra.mxu0 %v613
        %v751 = vpop.f32.mrf.mxu0
        %v752 = vadd.f32 %v374, %v751
        %v753 = vpop.f32.mrf.mxu0
        %v754 = vadd.f32 %v374, %v753
        %755 = vmatmul.bf16.gmra.mxu0 %v616
        %v756 = vpop.f32.mrf.mxu0
        %v757 = vadd.f32 %v374, %v756
        %v758 = vpop.f32.mrf.mxu0
        %v759 = vadd.f32 %v374, %v758
        %760 = vmatmul.bf16.gmra.mxu0 %v619
        %v761 = vpop.f32.mrf.mxu0
        %v762 = vadd.f32 %v374, %v761
        %v763 = vpop.f32.mrf.mxu0
        %v764 = vadd.f32 %v374, %v763
        %765 = vmatmul.bf16.gmra.mxu0 %v622
        %v766 = vpop.f32.mrf.mxu0
        %v767 = vadd.f32 %v374, %v766
        %v768 = vpop.f32.mrf.mxu0
        %v769 = vadd.f32 %v374, %v768
        %770 = vmatmul.bf16.gmra.mxu0 %v625
        %v771 = vpop.f32.mrf.mxu0
        %v772 = vadd.f32 %v374, %v771
        %v773 = vpop.f32.mrf.mxu0
        %v774 = vadd.f32 %v374, %v773
        %775 = vmatmul.bf16.gmra.mxu0 %v628
        %v776 = vpop.f32.mrf.mxu0
        %v777 = vadd.f32 %v374, %v776
        %v778 = vpop.f32.mrf.mxu0
        %v779 = vadd.f32 %v374, %v778
        %780 = vmatmul.bf16.gmra.mxu0 %v631
        %v781 = vpop.f32.mrf.mxu0
        %v782 = vadd.f32 %v374, %v781
        %v783 = vpop.f32.mrf.mxu0
        %v784 = vadd.f32 %v374, %v783
        %785 = vmatmul.bf16.gmra.mxu0 %v634
        %v786 = vpop.f32.mrf.mxu0
        %v787 = vadd.f32 %v374, %v786
        %v788 = vpop.f32.mrf.mxu0
        %v789 = vadd.f32 %v374, %v788
        %790 = vmatmul.bf16.gmra.mxu0 %v637
        %v791 = vpop.f32.mrf.mxu0
        %v792 = vadd.f32 %v374, %v791
        %v793 = vpop.f32.mrf.mxu0
        %v794 = vadd.f32 %v374, %v793
        %795 = vmatmul.bf16.gmra.mxu0 %v640
        %v796 = vpop.f32.mrf.mxu0
        %v797 = vadd.f32 %v374, %v796
        %v798 = vpop.f32.mrf.mxu0
        %v799 = vadd.f32 %v374, %v798
        %800 = vmatmul.bf16.gmra.mxu0 %v643
        %v801 = vpop.f32.mrf.mxu0
        %v802 = vadd.f32 %v374, %v801
        %v803 = vpop.f32.mrf.mxu0
        %v804 = vadd.f32 %v374, %v803
        %805 = vmatmul.bf16.gmra.mxu0 %v646
        %v806 = vpop.f32.mrf.mxu0
        %v807 = vadd.f32 %v374, %v806
        %v808 = vpop.f32.mrf.mxu0
        %v809 = vadd.f32 %v374, %v808
        %810 = vmatmul.bf16.gmra.mxu0 %v649
        %v811 = vpop.f32.mrf.mxu0
        %v812 = vadd.f32 %v374, %v811
        %v813 = vpop.f32.mrf.mxu0
        %v814 = vadd.f32 %v374, %v813
        %815 = vmatmul.bf16.gmra.mxu0 %v652
        %v816 = vpop.f32.mrf.mxu0
        %v817 = vadd.f32 %v374, %v816
        %v818 = vpop.f32.mrf.mxu0
        %v819 = vadd.f32 %v374, %v818
        %820 = vmatmul.bf16.gmra.mxu0 %v655
        %v821 = vpop.f32.mrf.mxu0
        %v822 = vadd.f32 %v374, %v821
        %v823 = vpop.f32.mrf.mxu0
        %v824 = vadd.f32 %v374, %v823
        %825 = vmatmul.bf16.gmra.mxu0 %v658
        %v826 = vpop.f32.mrf.mxu0
        %v827 = vadd.f32 %v374, %v826
        %v828 = vpop.f32.mrf.mxu0
        %v829 = vadd.f32 %v374, %v828
        %830 = vmatmul.bf16.gmra.mxu0 %v661
        %v831 = vpop.f32.mrf.mxu0
        %v832 = vadd.f32 %v374, %v831
        %v833 = vpop.f32.mrf.mxu0
        %v834 = vadd.f32 %v374, %v833
        %835 = vmatmul.bf16.gmra.mxu0 %v664
        %v836 = vpop.f32.mrf.mxu0
        %v837 = vadd.f32 %v374, %v836
        %v838 = vpop.f32.mrf.mxu0
        %v839 = vadd.f32 %v374, %v838
        %840 = vdwg.mxu0
        %v841 = vmax.f32 %v682, 0.0
        %v842 = vmax.f32 %v684, 0.0
        %v843 = vmax.f32 %v687, 0.0
        %v844 = vmax.f32 %v689, 0.0
        %v845 = vmax.f32 %v692, 0.0
        %v846 = vmax.f32 %v694, 0.0
        %v847 = vmax.f32 %v697, 0.0
        %v848 = vmax.f32 %v699, 0.0
        %v849 = vmax.f32 %v702, 0.0
        %v850 = vmax.f32 %v704, 0.0
        %v851 = vmax.f32 %v707, 0.0
        %v852 = vmax.f32 %v709, 0.0
        %v853 = vmax.f32 %v712, 0.0
        %v854 = vmax.f32 %v714, 0.0
        %v855 = vmax.f32 %v717, 0.0
        %v856 = vmax.f32 %v719, 0.0
        %v857 = vmax.f32 %v722, 0.0
        %v858 = vmax.f32 %v724, 0.0
        %v859 = vmax.f32 %v727, 0.0
        %v860 = vmax.f32 %v729, 0.0
        %v861 = vmax.f32 %v732, 0.0
        %v862 = vmax.f32 %v734, 0.0
        %v863 = vmax.f32 %v737, 0.0
        %v864 = vmax.f32 %v739, 0.0
        %v865 = vmax.f32 %v742, 0.0
        %v866 = vmax.f32 %v744, 0.0
        %v867 = vmax.f32 %v747, 0.0
        %v868 = vmax.f32 %v749, 0.0
        %v869 = vmax.f32 %v752, 0.0
        %v870 = vmax.f32 %v754, 0.0
        %v871 = vmax.f32 %v757, 0.0
        %v872 = vmax.f32 %v759, 0.0
        %v873 = vmax.f32 %v762, 0.0
        %v874 = vmax.f32 %v764, 0.0
        %v875 = vmax.f32 %v767, 0.0
        %v876 = vmax.f32 %v769, 0.0
        %v877 = vmax.f32 %v772, 0.0
        %v878 = vmax.f32 %v774, 0.0
        %v879 = vmax.f32 %v777, 0.0
        %v880 = vmax.f32 %v779, 0.0
        %v881 = vmax.f32 %v782, 0.0
        %v882 = vmax.f32 %v784, 0.0
        %v883 = vmax.f32 %v787, 0.0
        %v884 = vmax.f32 %v789, 0.0
        %v885 = vmax.f32 %v792, 0.0
        %v886 = vmax.f32 %v794, 0.0
        %v887 = vmax.f32 %v797, 0.0
        %v888 = vmax.f32 %v799, 0.0
        %v889 = vmax.f32 %v802, 0.0
        %v890 = vmax.f32 %v804, 0.0
        %v891 = vmax.f32 %v807, 0.0
        %v892 = vmax.f32 %v809, 0.0
        %v893 = vmax.f32 %v812, 0.0
        %v894 = vmax.f32 %v814, 0.0
        %v895 = vmax.f32 %v817, 0.0
        %v896 = vmax.f32 %v819, 0.0
        %v897 = vmax.f32 %v822, 0.0
        %v898 = vmax.f32 %v824, 0.0
        %v899 = vmax.f32 %v827, 0.0
        %v900 = vmax.f32 %v829, 0.0
        %v901 = vmax.f32 %v832, 0.0
        %v902 = vmax.f32 %v834, 0.0
        %v903 = vmax.f32 %v837, 0.0
        %v904 = vmax.f32 %v839, 0.0
        %v905 = vadd.f32 %v841, %v842
        %v906 = vadd.f32 %v905, %v843
        %v907 = vadd.f32 %v906, %v844
        %v908 = vadd.f32 %v907, %v845
        %v909 = vadd.f32 %v908, %v846
        %v910 = vadd.f32 %v909, %v847
        %v911 = vadd.f32 %v910, %v848
        %v912 = vrot.slane %v911, 4
        %v913 = vadd.f32 %v911, %v912
        %v914 = vrot.slane %v913, 2
        %v915 = vadd.f32 %v913, %v914
        %v916 = vrot.slane %v915, 1
        %v917 = vadd.f32 %v915, %v916
        %v918 = vadd.f32 %v849, %v850
        %v919 = vadd.f32 %v918, %v851
        %v920 = vadd.f32 %v919, %v852
        %v921 = vadd.f32 %v920, %v853
        %v922 = vadd.f32 %v921, %v854
        %v923 = vadd.f32 %v922, %v855
        %v924 = vadd.f32 %v923, %v856
        %v925 = vrot.slane %v924, 4
        %v926 = vadd.f32 %v924, %v925
        %v927 = vrot.slane %v926, 2
        %v928 = vadd.f32 %v926, %v927
        %v929 = vrot.slane %v928, 1
        %v930 = vadd.f32 %v928, %v929
        %v931 = vadd.f32 %v857, %v858
        %v932 = vadd.f32 %v931, %v859
        %v933 = vadd.f32 %v932, %v860
        %v934 = vadd.f32 %v933, %v861
        %v935 = vadd.f32 %v934, %v862
        %v936 = vadd.f32 %v935, %v863
        %v937 = vadd.f32 %v936, %v864
        %v938 = vrot.slane %v937, 4
        %v939 = vadd.f32 %v937, %v938
        %v940 = vrot.slane %v939, 2
        %v941 = vadd.f32 %v939, %v940
        %v942 = vrot.slane %v941, 1
        %v943 = vadd.f32 %v941, %v942
        %v944 = vadd.f32 %v865, %v866
        %v945 = vadd.f32 %v944, %v867
        %v946 = vadd.f32 %v945, %v868
        %v947 = vadd.f32 %v946, %v869
        %v948 = vadd.f32 %v947, %v870
        %v949 = vadd.f32 %v948, %v871
        %v950 = vadd.f32 %v949, %v872
        %v951 = vrot.slane %v950, 4
        %v952 = vadd.f32 %v950, %v951
        %v953 = vrot.slane %v952, 2
        %v954 = vadd.f32 %v952, %v953
        %v955 = vrot.slane %v954, 1
        %v956 = vadd.f32 %v954, %v955
        %v957 = vadd.f32 %v873, %v874
        %v958 = vadd.f32 %v957, %v875
        %v959 = vadd.f32 %v958, %v876
        %v960 = vadd.f32 %v959, %v877
        %v961 = vadd.f32 %v960, %v878
        %v962 = vadd.f32 %v961, %v879
        %v963 = vadd.f32 %v962, %v880
        %v964 = vrot.slane %v963, 4
        %v965 = vadd.f32 %v963, %v964
        %v966 = vrot.slane %v965, 2
        %v967 = vadd.f32 %v965, %v966
        %v968 = vrot.slane %v967, 1
        %v969 = vadd.f32 %v967, %v968
        %v970 = vadd.f32 %v881, %v882
        %v971 = vadd.f32 %v970, %v883
        %v972 = vadd.f32 %v971, %v884
        %v973 = vadd.f32 %v972, %v885
        %v974 = vadd.f32 %v973, %v886
        %v975 = vadd.f32 %v974, %v887
        %v976 = vadd.f32 %v975, %v888
        %v977 = vrot.slane %v976, 4
        %v978 = vadd.f32 %v976, %v977
        %v979 = vrot.slane %v978, 2
        %v980 = vadd.f32 %v978, %v979
        %v981 = vrot.slane %v980, 1
        %v982 = vadd.f32 %v980, %v981
        %v983 = vadd.f32 %v889, %v890
        %v984 = vadd.f32 %v983, %v891
        %v985 = vadd.f32 %v984, %v892
        %v986 = vadd.f32 %v985, %v893
        %v987 = vadd.f32 %v986, %v894
        %v988 = vadd.f32 %v987, %v895
        %v989 = vadd.f32 %v988, %v896
        %v990 = vrot.slane %v989, 4
        %v991 = vadd.f32 %v989, %v990
        %v992 = vrot.slane %v991, 2
        %v993 = vadd.f32 %v991, %v992
        %v994 = vrot.slane %v993, 1
        %v995 = vadd.f32 %v993, %v994
        %v996 = vadd.f32 %v897, %v898
        %v997 = vadd.f32 %v996, %v899
        %v998 = vadd.f32 %v997, %v900
        %v999 = vadd.f32 %v998, %v901
        %v1000 = vadd.f32 %v999, %v902
        %v1001 = vadd.f32 %v1000, %v903
        %v1002 = vadd.f32 %v1001, %v904
        %v1003 = vrot.slane %v1002, 4
        %v1004 = vadd.f32 %v1002, %v1003
        %v1005 = vrot.slane %v1004, 2
        %v1006 = vadd.f32 %v1004, %v1005
        %v1007 = vrot.slane %v1006, 1
        %v1008 = vadd.f32 %v1006, %v1007
        %v1009 = vrcp.pop 64.0
        %v1010 = vmul.f32 64.0, %v1009
        %v1011 = vsub.f32 1.0, %v1010
        %v1012 = vmul.f32 %v1009, %v1011
        %v1013 = vadd.f32 %v1009, %v1012
        %vm1014 = vweird.f32 %v1009
        %v1015 = vsel %vm1014, %v1009, %v1013
        %v1016 = vmul.f32 %v917, %v1015
        %v1017 = vmul.f32 %v930, %v1015
        %v1018 = vmul.f32 %v943, %v1015
        %v1019 = vmul.f32 %v956, %v1015
        %v1020 = vmul.f32 %v969, %v1015
        %v1021 = vmul.f32 %v982, %v1015
        %v1022 = vmul.f32 %v995, %v1015
        %v1023 = vmul.f32 %v1008, %v1015
        %v1024 = vpack.c.bf16 %v1016, %v1016
        %v1025 = vpack.c.bf16 %v1017, %v1017
        %v1026 = vpack.c.bf16 %v1018, %v1018
        %v1027 = vpack.c.bf16 %v1019, %v1019
        %v1028 = vpack.c.bf16 %v1020, %v1020
        %v1029 = vpack.c.bf16 %v1021, %v1021
        %v1030 = vpack.c.bf16 %v1022, %v1022
        %v1031 = vpack.c.bf16 %v1023, %v1023
        %v1032 = vld [vmem:[%s4] sm:$0xf]
        %v1033 = vld [vmem:[%s4 + $0x4] sm:$0xf]
        %v1034 = vld [vmem:[%s4 + $0x8] sm:$0xf]
        %v1035 = vld [vmem:[%s4 + $0xc] sm:$0xf]
        %v1036 = vld [vmem:[%s4 + $0x10] sm:$0xf]
        %v1037 = vld [vmem:[%s4 + $0x14] sm:$0xf]
        %v1038 = vld [vmem:[%s4 + $0x18] sm:$0xf]
        %v1039 = vld [vmem:[%s4 + $0x1c] sm:$0xf]
        %v1040 = vld [vmem:[%s4 + $0x20] sm:$0xf]
        %v1041 = vld [vmem:[%s4 + $0x24] sm:$0xf]
        %v1042 = vld [vmem:[%s4 + $0x28] sm:$0xf]
        %v1043 = vld [vmem:[%s4 + $0x2c] sm:$0xf]
        %v1044 = vld [vmem:[%s4 + $0x30] sm:$0xf]
        %v1045 = vld [vmem:[%s4 + $0x34] sm:$0xf]
        %v1046 = vld [vmem:[%s4 + $0x38] sm:$0xf]
        %v1047 = vld [vmem:[%s4 + $0x3c] sm:$0xf]
        %v1048 = vld [vmem:[%s295] sm:$0xf]
        %v1049 = vld [vmem:[%s5] sm:$0xf]
        %v1050 = vld [vmem:[%s5 + $0x4] sm:$0xf]
        %v1051 = vld [vmem:[%s5 + $0x8] sm:$0xf]
        %v1052 = vld [vmem:[%s5 + $0xc] sm:$0xf]
        %v1053 = vld [vmem:[%s5 + $0x10] sm:$0xf]
        %v1054 = vld [vmem:[%s5 + $0x14] sm:$0xf]
        %v1055 = vld [vmem:[%s5 + $0x18] sm:$0xf]
        %v1056 = vld [vmem:[%s5 + $0x1c] sm:$0xf]
        %v1057 = vld [vmem:[%s5 + $0x20] sm:$0xf]
        %v1058 = vld [vmem:[%s5 + $0x24] sm:$0x7]
        %v1069 = vunpack.c.l.b16 %v1049
        %v1070 = vunpack.c.l.b16 %v1050
        %v1071 = vunpack.c.l.b16 %v1051
        %v1072 = vunpack.c.l.b16 %v1052
        %v1073 = vunpack.c.l.b16 %v1053
        %v1074 = vunpack.c.l.b16 %v1054
        %v1075 = vunpack.c.l.b16 %v1055
        %v1076 = vunpack.c.l.b16 %v1056
        %v1077 = vunpack.c.l.b16 %v1057
        %v1078 = vunpack.c.l.b16 %v1058
        %v1079 = vpack.c.b16 %v1070, %v1069
        %v1080 = vpack.c.b16 %v1072, %v1071
        %v1081 = vpack.c.b16 %v1074, %v1073
        %v1082 = vpack.c.b16 %v1076, %v1075
        %v1083 = vpack.c.b16 %v1078, %v1077
        %vm1088 = vcmask 637952
        %v1090 = vsel %vm1088, %v1048, 0
        %vm1092 = vcmask 1046528
        %v1094 = vsel %vm1092, %v1083, 0
        %1096 = vmatpush.bf16.msra.mxu0 0
        %1097 = vmatpush.bf16.msra.mxu0 0
        %1098 = vmatpush.bf16.msra.mxu0 0
        %1099 = vmatpush.bf16.msra.mxu0 %v1094
        %1100 = vmatpush.bf16.msra.mxu0 %v1082
        %1101 = vmatpush.bf16.msra.mxu0 %v1081
        %1102 = vmatpush.bf16.msra.mxu0 %v1080
        %1103 = vmatpush.bf16.msra.mxu0 %v1079
        %1104 = vmatmul.bf16.gmra.mxu0 %v1090
        %v1105 = vpop.f32.mrf.mxu0
        %v1106 = vadd.f32 0.0, %v1105
        %v1107 = vpop.f32.mrf.mxu0
        %1108 = vdwg.mxu0
        %v1117 = vunpack.c.l.b16 %v1024
        %v1118 = vunpack.c.l.b16 %v1025
        %v1119 = vunpack.c.l.b16 %v1026
        %v1120 = vunpack.c.l.b16 %v1027
        %v1121 = vunpack.c.l.b16 %v1028
        %v1122 = vunpack.c.l.b16 %v1029
        %v1123 = vunpack.c.l.b16 %v1030
        %v1124 = vunpack.c.l.b16 %v1031
        %vm1125 = vcmask 1041409
        %v1126 = vsel %vm1125, %v1118, %v1117
        %vm1127 = vcmask 1042434
        %v1128 = vsel %vm1127, %v1119, %v1126
        %vm1129 = vcmask 1043459
        %v1130 = vsel %vm1129, %v1120, %v1128
        %vm1131 = vcmask 1044484
        %v1132 = vsel %vm1131, %v1121, %v1130
        %vm1133 = vcmask 1045509
        %v1134 = vsel %vm1133, %v1122, %v1132
        %vm1135 = vcmask 1046534
        %v1136 = vsel %vm1135, %v1123, %v1134
        %vm1137 = vcmask 1047559
        %v1138 = vsel %vm1137, %v1124, %v1136
        %v1139 = vpack.c.b16 %v1138, %v1138
        %v1157 = vunpack.c.l.b16 %v1032
        %v1158 = vunpack.c.l.b16 %v1033
        %v1159 = vunpack.c.l.b16 %v1034
        %v1160 = vunpack.c.l.b16 %v1035
        %v1161 = vunpack.c.l.b16 %v1036
        %v1162 = vunpack.c.l.b16 %v1037
        %v1163 = vunpack.c.l.b16 %v1038
        %v1164 = vunpack.c.l.b16 %v1039
        %v1165 = vunpack.c.l.b16 %v1040
        %v1166 = vunpack.c.l.b16 %v1041
        %v1167 = vunpack.c.l.b16 %v1042
        %v1168 = vunpack.c.l.b16 %v1043
        %v1169 = vunpack.c.l.b16 %v1044
        %v1170 = vunpack.c.l.b16 %v1045
        %v1171 = vunpack.c.l.b16 %v1046
        %v1172 = vunpack.c.l.b16 %v1047
        %v1173 = vpack.c.b16 %v1158, %v1157
        %v1174 = vpack.c.b16 %v1160, %v1159
        %v1175 = vpack.c.b16 %v1162, %v1161
        %v1176 = vpack.c.b16 %v1164, %v1163
        %v1177 = vpack.c.b16 %v1166, %v1165
        %v1178 = vpack.c.b16 %v1168, %v1167
        %v1179 = vpack.c.b16 %v1170, %v1169
        %v1180 = vpack.c.b16 %v1172, %v1171
        %1189 = vmatpush.bf16.msra.mxu0 %v1180
        %1190 = vmatpush.bf16.msra.mxu0 %v1179
        %1191 = vmatpush.bf16.msra.mxu0 %v1178
        %1192 = vmatpush.bf16.msra.mxu0 %v1177
        %1193 = vmatpush.bf16.msra.mxu0 %v1176
        %1194 = vmatpush.bf16.msra.mxu0 %v1175
        %1195 = vmatpush.bf16.msra.mxu0 %v1174
        %1196 = vmatpush.bf16.msra.mxu0 %v1173
        %1197 = vmatmul.bf16.gmra.mxu0 %v1139
        %v1198 = vpop.f32.mrf.mxu0
        %v1199 = vadd.f32 %v1106, %v1198
        %v1200 = vpop.f32.mrf.mxu0
        %1201 = vdwg.mxu0
        %v1202 = vld [vmem:[%s6] sm:$0x1]
        %v1204 = vperm.slane %v1202, 0
        %v1206 = vadd.f32 %v1199, %v1204
        %1207 = vst [vmem:[%s285] sm:$0xff] %v1206
        %s1208 = sand.u32 %s186, 1
        %s1209 = scalar_lea.sflag [#allocation3], %s1208
        %s1210 = sand.u32 %s186, 1
        %s1211 = smul.addr %s1210, 8
        %s1212 = scalar_lea.vmem [#allocation2], %s1211
        // Predicated region
        $region49: #{tpu_custom_call.1} parent=47 // pred_check
          %p1213 = pneg %p196
        $region50: #{tpu_custom_call.1} parent=47 // pred_check_branch
          %1215 = sbr.rel (%p1213) target = $region52
        $region51: #{tpu_custom_call.1} parent=47 // pred_region
          %1217 = vsyncadd %s1209, 0
          %s1218 = smul.addr %s21, 8
          %s1219 = scalar_lea.hbm %s7, %s1218
          %s1221 = sshll.u32 %s1212, 4
          %s1222 = int_to_ptr.vmem [resolvable:$true] %s1221
          %s1223 = sshll.u32 %s1219, 4
          %s1224 = int_to_ptr.hbm [resolvable:$true] %s1223
          %1226 = dma.vmem_to_hbm [thread:$0]  %s1222, 128, %s1224, %s1209
        $region52: #{tpu_custom_call.1} parent=47 // pred_fallthru
          _
      $region48: #{tpu_custom_call.1} parent=5 // pred_fallthru
        _
      %p1227 = scmp.le.s32.totalorder 2, %s16
      // Predicated region
      $region53: #{tpu_custom_call.1} parent=5 // pred_check
        %p1228 = pneg %p1227
      $region54: #{tpu_custom_call.1} parent=5 // pred_check_branch
        %1230 = sbr.rel (%p1228) target = $region56
      $region55: #{tpu_custom_call.1} parent=5 // pred_region
        %s1231 = ssub.s32 %s16, 2
        // Predicated region
        $region57: #{tpu_custom_call.1} parent=55 // pred_check
          %p1232 = pneg %p202
        $region58: #{tpu_custom_call.1} parent=55 // pred_check_branch
          %1234 = sbr.rel (%p1232) target = $region60
        $region59: #{tpu_custom_call.1} parent=55 // pred_region
          %s1235 = sand.u32 %s187, 1
          %s1236 = scalar_lea.sflag [#allocation3], %s1235
          %s1237 = sand.u32 %s187, 1
          %s1238 = smul.addr %s1237, 8
          %s1239 = scalar_lea.vmem [#allocation2], %s1238
          %1241 = dma.done %s1236, 128
        $region60: #{tpu_custom_call.1} parent=55 // pred_fallthru
          _
      $region56: #{tpu_custom_call.1} parent=5 // pred_fallthru
        _
    $region6: #{tpu_custom_call.1} parent=1 // loop_footer
      %s20 = sadd.s32 1, %s16
    $region7: #{tpu_custom_call.1} parent=1 // loop_footer_branch
      %15 = sbr.rel target = $region3
    $region8: #{tpu_custom_call.1} parent=1 // loop_exit
      _
    %1242 = vsyncpa [#allocation3], 1
    %s1243 = scalar_lea.sflag [#allocation3], 1
    %1244 = vsyncpa %s1243, 1

</llo_original>
